<compile_context>
chip_gen: v6e
topology: v6e:2x2x1
jax: 0.10.0
libtpu: 0.0.40
codegen_flags: <defaults>
</compile_context>

<pallas_src>
import functools

import jax
import jax.numpy as jnp
from jax.experimental import pallas as pl
from jax.experimental.pallas import tpu as pltpu

LANE = 128
# ~2 MiB per block -> with double-buffered input + output (4 buffers) the
# working set stays ~8 MiB, safe on v5e (16 MiB default scoped VMEM) and v7x.
_TARGET_BLOCK_BYTES = 2 * 1024 * 1024


def _gaussian_kernel(alpha_ref, x_ref, o_ref, *, normalized):
    # Scalar prologue (SMEM / sreg): coeff = -1 / (2 * alpha^2).
    a = alpha_ref[0]
    coeff = -1.0 / (2.0 * a * a)

    x = x_ref[...].astype(jnp.float32)
    y = jnp.exp(x * x * coeff)                      # EUP
    if normalized:
        # (y - 0.7) / 0.28 rewritten as a fused mul+sub with trace-time
        # constants: keeps the divide off the EUP slot already carrying exp.
        y = y * (1.0 / 0.28) - (0.7 / 0.28)         # VPU
    o_ref[...] = y.astype(o_ref.dtype)


def _pick_width(n):
    """Largest lane-dense width (multiple of 128) that divides n, or None."""
    for w in (4096, 2048, 1024, 512, 256, 128):
        if n % w == 0:
            return w
    return None


def gaussian_activation(x, alpha, normalized=True):
    """exp(-x^2 / (2*alpha^2)), optionally normalized, elementwise on TPU."""
    orig_shape = x.shape
    dtype = x.dtype
    n = x.size
    itemsize = jnp.dtype(dtype).itemsize
    # Packed sublane multiple: 8 for f32, 16 for bf16, 32 for 8-bit types.
    packing = max(8, 32 // itemsize)

    flat = jnp.ravel(x)
    w = _pick_width(n)
    pad = 0
    if w is None:
        # Rare path: total size not a multiple of 128 -> pad only the tail.
        pad = (-n) % LANE
        flat = jnp.pad(flat, (0, pad))
        w = LANE
    rows = (n + pad) // w
    x2d = flat.reshape(rows, w)                     # metadata-only reshape

    # Row-tile size targeting ~2 MiB blocks, rounded to the sublane packing.
    tm = max(packing, _TARGET_BLOCK_BYTES // (w * itemsize))
    tm = (tm // packing) * packing
    if tm >= rows:
        tm = rows                                   # full dim is always legal
    grid = (pl.cdiv(rows, tm),)

    alpha_arr = jnp.asarray(alpha, dtype=jnp.float32).reshape((1,))
    kernel = functools.partial(_gaussian_kernel, normalized=normalized)

    out2d = pl.pallas_call(
        kernel,
        out_shape=jax.ShapeDtypeStruct((rows, w), dtype),
        grid_spec=pltpu.PrefetchScalarGridSpec(
            num_scalar_prefetch=0,
            grid=grid,
            in_specs=[
                pl.BlockSpec(memory_space=pltpu.SMEM),     # alpha scalar
                pl.BlockSpec((tm, w), lambda i: (i, 0)),   # x row tile
            ],
            out_specs=pl.BlockSpec((tm, w), lambda i: (i, 0)),
        ),
        compiler_params=pltpu.CompilerParams(
            dimension_semantics=("parallel",),
        ),
    )(alpha_arr, x2d)

    out = out2d.reshape(-1)
    if pad:
        out = out[:n]
    return out.reshape(orig_shape)


def gaussian_activation_ref(x, alpha, normalized=True):
    y = jnp.exp(-(x ** 2) / (2.0 * alpha ** 2))
    if normalized:
        y = (y - 0.7) / 0.28
    return y


if __name__ == "__main__":
    key = jax.random.PRNGKey(0)
    # NCHW input consistent with a ConvNeXt feature map (small test shape).
    x = jax.random.normal(key, (2, 4, 16, 16), dtype=jnp.float32)

    # Matches nn.Parameter(torch.tensor(1.0)).
    alpha = jnp.float32(1.0)

    out = gaussian_activation(x, alpha, normalized=True)
    out = jax.block_until_ready(out)

    ref = gaussian_activation_ref(x, alpha, normalized=True)
    assert out.shape == x.shape and out.dtype == x.dtype
    assert jnp.allclose(out, ref, atol=1e-5, rtol=1e-5), "mismatch vs reference"

    print("KERNEL_OK")
</pallas_src>

<mosaic_0001>
module attributes {stable_mosaic.version = 11 : i64} {
  func.func @_gaussian_kernel(%arg0: i32, %arg1: memref<1xf32, #tpu.memory_space<smem>>, %arg2: memref<1x2048xf32, #tpu.memory_space<vmem>>, %arg3: memref<1x2048xf32, #tpu.memory_space<vmem>>) attributes {dimension_semantics = [#tpu.dimension_semantics<parallel>], iteration_bounds = array<i64: 1>, scalar_prefetch = 0 : i64, scratch_operands = 0 : i64, tpu.core_type = #tpu.core_type<tc>, window_params = [{transform_indices = @transform_0, window_bounds = array<i64: 1>}, {transform_indices = @transform_1, window_bounds = array<i64: 1, 2048>}, {transform_indices = @transform_2, window_bounds = array<i64: 1, 2048>}]} {
    %c0 = arith.constant 0 : index
    %0 = memref.load %arg1[%c0] : memref<1xf32, #tpu.memory_space<smem>>
    %cst = arith.constant 2.000000e+00 : f32
    %1 = arith.mulf %cst, %0 : f32
    %2 = arith.mulf %1, %0 : f32
    %cst_0 = arith.constant -1.000000e+00 : f32
    %3 = arith.divf %cst_0, %2 : f32
    %c0_1 = arith.constant 0 : index
    %c0_2 = arith.constant 0 : index
    %4 = vector.load %arg2[%c0_1, %c0_2] : memref<1x2048xf32, #tpu.memory_space<vmem>>, vector<1x2048xf32>
    %5 = arith.mulf %4, %4 : vector<1x2048xf32>
    %6 = vector.broadcast %3 : f32 to vector<1x2048xf32>
    %7 = arith.mulf %5, %6 : vector<1x2048xf32>
    %8 = math.exp %7 : vector<1x2048xf32>
    %cst_3 = arith.constant 3.57142854 : f32
    %9 = vector.broadcast %cst_3 : f32 to vector<1x2048xf32>
    %10 = arith.mulf %8, %9 : vector<1x2048xf32>
    %cst_4 = arith.constant 2.500000e+00 : f32
    %11 = vector.broadcast %cst_4 : f32 to vector<1x2048xf32>
    %12 = arith.subf %10, %11 : vector<1x2048xf32>
    %c0_5 = arith.constant 0 : index
    %c0_6 = arith.constant 0 : index
    %13 = vector.load %arg3[%c0_5, %c0_6] : memref<1x2048xf32, #tpu.memory_space<vmem>>, vector<1x2048xf32>
    tpu.vector_store %arg3[%c0_5, %c0_6], %12 {strides = array<i32>} : memref<1x2048xf32, #tpu.memory_space<vmem>>, vector<1x2048xf32>,
    return
  }
  func.func @transform_0(%arg0: i32) -> i32 {
    %c0_i32 = arith.constant 0 : i32
    %c0_i32_0 = arith.constant 0 : i32
    return %c0_i32 : i32
  }
  func.func @transform_1(%arg0: i32) -> (i32, i32) {
    %c0_i32 = arith.constant 0 : i32
    %c0_i32_0 = arith.constant 0 : i32
    return %arg0, %c0_i32 : i32, i32
  }
  func.func @transform_2(%arg0: i32) -> (i32, i32) {
    %c0_i32 = arith.constant 0 : i32
    %c0_i32_0 = arith.constant 0 : i32
    return %arg0, %c0_i32 : i32, i32
  }
}

</mosaic_0001>

<llo_original>
// kernel: tpu_custom_call.1
$region0: #{tpu_custom_call.1}
  #allocation0 [shape = 'u32[]', space=smem, size = 0x4, offset = 0x4, fixed_abs, tag = 'smem constant byte address 0x4 - core index']
  #allocation1 [shape = 'u32[144,128]{1,0:T(1,128)}', space=vmem, size = 0x12000, scoped, tag = 'internal scratch']
  #allocation2 [shape = 'f32[1]{0:T(128)S(6)}', space=smem, size = 0x200, scoped, tag = 'scoped memory for tpu_custom_call.1']
  %s0 = inlined_call_operand.<no memory space> [shape: f32[1], index: 0, kind: input, shape index: {}]
  %s1 = inlined_call_operand.hbm [shape: f32[1,2048], index: 1, kind: input, shape index: {}]
  %s2 = inlined_call_operand.hbm [shape: f32[1,2048], index: 2, kind: output, shape index: {}]
  %s3 = sld [smem:[#allocation0]]
  $region22: #{tpu_custom_call.1} parent=0
    _
  %s5 = ssub.s32 1, %s3
  %s6 = scalar_select 0, %s5, %s3
  %7 = sst [smem:[#allocation2]] %s0
  $region1: #{tpu_custom_call.1} parent=0
    #allocation3 [shape = 'u8[8192]{0}', space=vmem, size = 0x2000, scoped, tag = 'input window, operand 1, single buffered']
    #allocation4 [shape = 's32[1]{0}', space=sflag, size = 0x4, scoped, tag = 'scoped memory for tpu_custom_call.1']
    #allocation5 [shape = 's32[1]{0}', space=sflag, size = 0x4, scoped, tag = 'scoped memory for tpu_custom_call.1']
    #allocation6 [shape = 'u8[8192]{0}', space=vmem, size = 0x2000, scoped, tag = 'output window, operand 0, single buffered']
    %8 = vsyncpa [#allocation4], 0
    %9 = vsyncpa [#allocation5], 0
    // Predicated region
    $region2: #{tpu_custom_call.1} parent=1 // pred_check
      _
    $region3: #{tpu_custom_call.1} parent=1 // pred_check_branch
      %11 = sbr.rel (0) target = $region5
    $region4: #{tpu_custom_call.1} parent=1 // pred_region
      _
    $region5: #{tpu_custom_call.1} parent=1 // pred_fallthru
      _
    // Predicated region
    $region6: #{tpu_custom_call.1} parent=1 // pred_check
      _
    $region7: #{tpu_custom_call.1} parent=1 // pred_check_branch
      %13 = sbr.rel (0) target = $region9
    $region8: #{tpu_custom_call.1} parent=1 // pred_region
      %s15 = ssub.s32 256, 256
      %16 = vsyncadd [#allocation4], %s15
      %s18 = sshll.u32 [#allocation3], 4
      %s19 = int_to_ptr.vmem [resolvable:$true] %s18
      %21 = dma.hbm_to_vmem [thread:$0]  %s1, 256, %s19, [#allocation4]
    $region9: #{tpu_custom_call.1} parent=1 // pred_fallthru
      _
    // Predicated region
    $region10: #{tpu_custom_call.1} parent=1 // pred_check
      _
    $region11: #{tpu_custom_call.1} parent=1 // pred_check_branch
      %23 = sbr.rel (0) target = $region13
    $region12: #{tpu_custom_call.1} parent=1 // pred_region
      %24 = dma.done [#allocation4], 256
    $region13: #{tpu_custom_call.1} parent=1 // pred_fallthru
      _
    %s25 = sld [smem:[#allocation2]]
    %s26 = smul.f32 %s25, 2.0
    %s27 = smul.f32 %s26, %s25
    %v28 = vstv %s27
    %v29 = vrcp.pop %v28
    %s30 = vtos %v29
    %s31 = smul.f32 -1.0, %s30
    %v32 = vld [vmem:[#allocation3] sm:$0xff]
    %v33 = vld [vmem:[#allocation3 + $0x8] sm:$0xff]
    %v34 = vmul.f32 %v32, %v32
    %v35 = vmul.f32 %v33, %v33
    %v36 = vstv %s31
    %v37 = vmul.f32 %v34, %v36
    %v38 = vmul.f32 %v35, %v36
    %v39 = vmul.f32 %v37, 1.442695
    %v40 = vpow.pop %v39
    %v41 = vmul.f32 %v38, 1.442695
    %v42 = vpow.pop %v41
    %v43 = vmul.f32 %v40, 3.5714285
    %v44 = vmul.f32 %v42, 3.5714285
    %v45 = vsub.f32 %v43, 2.5
    %v46 = vsub.f32 %v44, 2.5
    %47 = vst [vmem:[#allocation6] sm:$0xff] %v45
    %48 = vst [vmem:[#allocation6 + $0x8] sm:$0xff] %v46
    // Predicated region
    $region14: #{tpu_custom_call.1} parent=1 // pred_check
      _
    $region15: #{tpu_custom_call.1} parent=1 // pred_check_branch
      %50 = sbr.rel (0) target = $region17
    $region16: #{tpu_custom_call.1} parent=1 // pred_region
      %s52 = ssub.s32 256, 256
      %53 = vsyncadd [#allocation5], %s52
      %s55 = sshll.u32 [#allocation6], 4
      %s56 = int_to_ptr.vmem [resolvable:$true] %s55
      %58 = dma.vmem_to_hbm [thread:$0]  %s56, 256, %s2, [#allocation5]
    $region17: #{tpu_custom_call.1} parent=1 // pred_fallthru
      _
    // Predicated region
    $region18: #{tpu_custom_call.1} parent=1 // pred_check
      _
    $region19: #{tpu_custom_call.1} parent=1 // pred_check_branch
      %60 = sbr.rel (0) target = $region21
    $region20: #{tpu_custom_call.1} parent=1 // pred_region
      %61 = dma.done [#allocation5], 256
    $region21: #{tpu_custom_call.1} parent=1 // pred_fallthru
      _
    %62 = vsyncpa [#allocation4], 1
    %63 = vsyncpa [#allocation5], 1

</llo_original>
